<compile_context>
chip_gen: v7x
topology: tpu7x:2x2x1
jax: 0.10.0
libtpu: 0.0.40
codegen_flags: <defaults>
</compile_context>

<pallas_src>
import functools

import jax
import jax.numpy as jnp
from jax.experimental import pallas as pl
from jax.experimental.pallas import tpu as pltpu


def _sublayer_connection_kernel(x_ref, a_ref, b_ref, o_ref, *, feat, eps):
    # Load tile; accumulate statistics in f32.  Skip the cast when the I/O
    # dtype already is f32 (no full-tile VPU convert).
    x = x_ref[...]                                          # (TM, F)
    if x.dtype != jnp.float32:
        x = x.astype(jnp.float32)

    # Centered (numerically robust) unbiased variance, matching torch.std.
    mean = jnp.sum(x, axis=-1, keepdims=True) * (1.0 / feat)        # (TM, 1)
    d = x - mean                                                     # (TM, F)
    var = jnp.sum(d * d, axis=-1, keepdims=True) * (1.0 / (feat - 1))
    std = jnp.sqrt(var)

    # One reciprocal per row (EUP slot, effectively free), then a broadcast
    # multiply instead of a full-tile divide.  approx=False keeps 1e-5 accuracy.
    inv = pl.reciprocal(std + eps, approx=False)                     # (TM, 1)

    a = a_ref[...]
    b = b_ref[...]
    if a.dtype != jnp.float32:
        a = a.astype(jnp.float32)
    if b.dtype != jnp.float32:
        b = b.astype(jnp.float32)

    normed = a * (d * inv) + b
    # Residual connection.  NOTE: statistics are strictly per-row, so a padded
    # partial last row-tile only produces garbage in rows whose outputs are
    # discarded by the BlockSpec — safe as long as no cross-row reduction is
    # ever added to this kernel.
    o_ref[...] = (x + normed).astype(o_ref.dtype)


def _vmem_budget_bytes():
    """(working-set budget, vmem_limit_bytes) per TPU generation."""
    try:
        kind = jax.devices()[0].device_kind.lower()
    except Exception:  # detection failure -> most conservative (v5e) numbers
        kind = ""
    is_v5_lite = ("v5 lite" in kind) or ("v5e" in kind) or ("v5litepod" in kind)
    if is_v5_lite:
        # v5e: 16 MiB scoped default — leave headroom.
        return 12 * 1024 * 1024, 16 * 1024 * 1024
    # v6e / v7x (and larger-VMEM parts): 32 MiB scoped default.
    return 24 * 1024 * 1024, 32 * 1024 * 1024


def _choose_row_tile(rows, feat, itemsize, budget_bytes):
    """Row-tile size that pipelines well and fits the generation's VMEM budget."""
    # Sublane packing: 8 rows/f32, 16 rows/bf16, 32 rows/int8-fp8.
    sublane = max(8, 32 // max(itemsize, 1))

    # Per row of a tile:
    #   double-buffered input        : 2 * feat * itemsize
    #   double-buffered output       : 2 * feat * itemsize
    #   in-kernel f32 working copies : ~3 * feat * 4   (x, d, normed live)
    per_row_bytes = 4 * feat * itemsize + 3 * feat * 4
    tm = budget_bytes // max(per_row_bytes, 1)
    tm = min(tm, rows, 4096)

    if tm >= rows:
        # Whole array fits in one tile.  If it is large enough that the
        # ~0.35us/step overhead is negligible, still split in two so v7x's
        # second TensorCore has a row tile to work on ("parallel" axis).
        full_tile_bytes = rows * feat * itemsize
        if rows >= 4 * sublane and full_tile_bytes >= (1 << 20):
            half = (rows // 2 // sublane) * sublane
            return max(sublane, half)
        return rows                    # full-extent block is always legal
    return max(sublane, (tm // sublane) * sublane)


def sublayer_connection(x, a_2, b_2, eps=1e-6):
    """y = x + LayerNorm(x), fused in one row-tiled Pallas kernel.

    x:   (batch, seq, features)  float32 or bfloat16
    a_2: (features,) scale
    b_2: (features,) bias

    Production shapes should use features % 128 == 0 so loads/VPU ops/stores
    are lane-dense; F < 128 masks most of the lane bandwidth on every op.
    """
    B, S, F = x.shape
    rows = B * S
    x2d = x.reshape(rows, F)
    a2d = a_2.reshape(1, F)
    b2d = b_2.reshape(1, F)

    itemsize = jnp.dtype(x.dtype).itemsize
    budget_bytes, vmem_limit = _vmem_budget_bytes()
    tm = _choose_row_tile(rows, F, itemsize, budget_bytes)
    grid = (pl.cdiv(rows, tm),)

    kernel = functools.partial(_sublayer_connection_kernel, feat=F, eps=eps)

    out2d = pl.pallas_call(
        kernel,
        out_shape=jax.ShapeDtypeStruct((rows, F), x.dtype),
        grid=grid,
        in_specs=[
            # TODO(synk): if a profile shows exposed DMA at small forced tiles
            # (very wide F), add pipeline_mode=pl.Buffered(3) here.
            pl.BlockSpec((tm, F), lambda i: (i, 0)),   # x row tile
            pl.BlockSpec((1, F), lambda i: (0, 0)),    # scale (resident)
            pl.BlockSpec((1, F), lambda i: (0, 0)),    # bias  (resident)
        ],
        out_specs=pl.BlockSpec((tm, F), lambda i: (i, 0)),
        compiler_params=pltpu.CompilerParams(
            # Row tiles are independent -> shard across v7x's 2 TensorCores
            # (neutral on the single-TC v5e/v6e).
            dimension_semantics=("parallel",),
            vmem_limit_bytes=vmem_limit,
        ),
    )(x2d, a2d, b2d)

    return out2d.reshape(B, S, F)


def _reference(x, a_2, b_2, eps=1e-6):
    x = x.astype(jnp.float32)
    mean = jnp.mean(x, axis=-1, keepdims=True)
    d = x - mean
    var = jnp.sum(d * d, axis=-1, keepdims=True) / (x.shape[-1] - 1)
    std = jnp.sqrt(var)
    return x + (a_2 * d / (std + eps) + b_2)


if __name__ == "__main__":
    key = jax.random.PRNGKey(0)
    B, S, F = 2, 8, 32
    # TODO(synk): F=32 (<128) leaves output stores lane-masked; production
    # feature dims should be multiples of 128 for lane-dense stores.
    x = jax.random.normal(key, (B, S, F), dtype=jnp.float32)

    # Deterministic parameter init matching LayerNorm.__init__:
    # a_2 = ones(features), b_2 = zeros(features).  Dropout has no effect in
    # this forward (it is never applied in SublayerConnection.forward).
    a_2 = jnp.ones((F,), dtype=jnp.float32)
    b_2 = jnp.zeros((F,), dtype=jnp.float32)

    y = sublayer_connection(x, a_2, b_2)
    jax.block_until_ready(y)

    y_ref = _reference(x, a_2, b_2)
    assert y.shape == (B, S, F)
    assert jnp.allclose(y, y_ref, atol=1e-5, rtol=1e-5)

    print("KERNEL_OK")
</pallas_src>

<mosaic_0001>
module attributes {stable_mosaic.version = 11 : i64} {
  func.func @_sublayer_connection_kernel(%arg0: i32, %arg1: memref<16x32xf32, #tpu.memory_space<vmem>>, %arg2: memref<1x32xf32, #tpu.memory_space<vmem>>, %arg3: memref<1x32xf32, #tpu.memory_space<vmem>>, %arg4: memref<16x32xf32, #tpu.memory_space<vmem>>) attributes {dimension_semantics = [#tpu.dimension_semantics<parallel>], iteration_bounds = array<i64: 1>, scalar_prefetch = 0 : i64, scratch_operands = 0 : i64, tpu.core_type = #tpu.core_type<tc>, window_params = [{transform_indices = @transform_0, window_bounds = array<i64: 16, 32>}, {pipeline_mode = #tpu.pipeline_mode<synchronous>, transform_indices = @transform_1, window_bounds = array<i64: 1, 32>}, {pipeline_mode = #tpu.pipeline_mode<synchronous>, transform_indices = @transform_2, window_bounds = array<i64: 1, 32>}, {transform_indices = @transform_3, window_bounds = array<i64: 16, 32>}]} {
    %c0 = arith.constant 0 : index
    %c0_0 = arith.constant 0 : index
    %0 = vector.load %arg1[%c0, %c0_0] : memref<16x32xf32, #tpu.memory_space<vmem>>, vector<16x32xf32>
    %cst = arith.constant dense<0.000000e+00> : vector<16xf32>
    %1 = vector.multi_reduction <add>, %0, %cst [1] : vector<16x32xf32> to vector<16xf32>
    %2 = vector.shape_cast %1 : vector<16xf32> to vector<16x1xf32>
    %cst_1 = arith.constant 3.125000e-02 : f32
    %3 = vector.broadcast %cst_1 : f32 to vector<16x1xf32>
    %4 = arith.mulf %2, %3 : vector<16x1xf32>
    %5 = vector.broadcast %4 : vector<16x1xf32> to vector<16x32xf32>
    %6 = arith.subf %0, %5 : vector<16x32xf32>
    %7 = arith.mulf %6, %6 : vector<16x32xf32>
    %cst_2 = arith.constant dense<0.000000e+00> : vector<16xf32>
    %8 = vector.multi_reduction <add>, %7, %cst_2 [1] : vector<16x32xf32> to vector<16xf32>
    %9 = vector.shape_cast %8 : vector<16xf32> to vector<16x1xf32>
    %cst_3 = arith.constant 0.0322580636 : f32
    %10 = vector.broadcast %cst_3 : f32 to vector<16x1xf32>
    %11 = arith.mulf %9, %10 : vector<16x1xf32>
    %12 = math.sqrt %11 : vector<16x1xf32>
    %cst_4 = arith.constant 9.99999997E-7 : f32
    %13 = vector.broadcast %cst_4 : f32 to vector<16x1xf32>
    %14 = arith.addf %12, %13 : vector<16x1xf32>
    %15 = tpu.reciprocal %14 : vector<16x1xf32> -> vector<16x1xf32>
    %c0_5 = arith.constant 0 : index
    %c0_6 = arith.constant 0 : index
    %16 = vector.load %arg2[%c0_5, %c0_6] : memref<1x32xf32, #tpu.memory_space<vmem>>, vector<1x32xf32>
    %c0_7 = arith.constant 0 : index
    %c0_8 = arith.constant 0 : index
    %17 = vector.load %arg3[%c0_7, %c0_8] : memref<1x32xf32, #tpu.memory_space<vmem>>, vector<1x32xf32>
    %18 = vector.broadcast %15 : vector<16x1xf32> to vector<16x32xf32>
    %19 = arith.mulf %6, %18 : vector<16x32xf32>
    %20 = vector.broadcast %16 : vector<1x32xf32> to vector<16x32xf32>
    %21 = arith.mulf %20, %19 : vector<16x32xf32>
    %22 = vector.broadcast %17 : vector<1x32xf32> to vector<16x32xf32>
    %23 = arith.addf %21, %22 : vector<16x32xf32>
    %24 = arith.addf %0, %23 : vector<16x32xf32>
    %c0_9 = arith.constant 0 : index
    %c0_10 = arith.constant 0 : index
    %25 = vector.load %arg4[%c0_9, %c0_10] : memref<16x32xf32, #tpu.memory_space<vmem>>, vector<16x32xf32>
    tpu.vector_store %arg4[%c0_9, %c0_10], %24 {strides = array<i32>} : memref<16x32xf32, #tpu.memory_space<vmem>>, vector<16x32xf32>,
    return
  }
  func.func @transform_0(%arg0: i32) -> (i32, i32) {
    %c0_i32 = arith.constant 0 : i32
    %c0_i32_0 = arith.constant 0 : i32
    return %arg0, %c0_i32 : i32, i32
  }
  func.func @transform_1(%arg0: i32) -> (i32, i32) {
    %c0_i32 = arith.constant 0 : i32
    %c0_i32_0 = arith.constant 0 : i32
    %c0_i32_1 = arith.constant 0 : i32
    return %c0_i32, %c0_i32_0 : i32, i32
  }
  func.func @transform_2(%arg0: i32) -> (i32, i32) {
    %c0_i32 = arith.constant 0 : i32
    %c0_i32_0 = arith.constant 0 : i32
    %c0_i32_1 = arith.constant 0 : i32
    return %c0_i32, %c0_i32_0 : i32, i32
  }
  func.func @transform_3(%arg0: i32) -> (i32, i32) {
    %c0_i32 = arith.constant 0 : i32
    %c0_i32_0 = arith.constant 0 : i32
    return %arg0, %c0_i32 : i32, i32
  }
}

</mosaic_0001>

<llo_original>
// kernel: tpu_custom_call.1
$region0: #{tpu_custom_call.1}
  #allocation0 [shape = 'u32[]', space=smem, size = 0x4, offset = 0x4, fixed_abs, tag = 'smem constant byte address 0x4 - core index']
  #allocation1 [shape = 'u32[144,128]{1,0:T(1,128)}', space=vmem, size = 0x12000, scoped, tag = 'internal scratch']
  %s0 = inlined_call_operand.hbm [shape: f32[16,32], index: 0, kind: input, shape index: {}]
  %s1 = inlined_call_operand.vmem [shape: f32[1,32], index: 1, kind: input, shape index: {}]
  %s2 = inlined_call_operand.vmem [shape: f32[1,32], index: 2, kind: input, shape index: {}]
  %s3 = inlined_call_operand.hbm [shape: f32[16,32], index: 3, kind: output, shape index: {}]
  %s4 = sld [smem:[#allocation0]]
  $region26: #{tpu_custom_call.1} parent=0
    _
  %s6 = ssub.s32 1, %s4
  %s7 = scalar_select 0, %s6, %s4
  $region1: #{tpu_custom_call.1} parent=0
    #allocation2 [shape = 'u8[8192]{0}', space=vmem, size = 0x2000, scoped, tag = 'input window, operand 0, single buffered']
    #allocation3 [shape = 's32[1]{0}', space=sflag, size = 0x4, scoped, tag = 'scoped memory for tpu_custom_call.1']
    #allocation4 [shape = 's32[1]{0}', space=sflag, size = 0x4, scoped, tag = 'scoped memory for tpu_custom_call.1']
    #allocation5 [shape = 'u8[8192]{0}', space=vmem, size = 0x2000, scoped, tag = 'output window, operand 0, single buffered']
    %8 = vsyncpa [#allocation3], 0
    %9 = vsyncpa [#allocation4], 0
    // Predicated region
    $region2: #{tpu_custom_call.1} parent=1 // pred_check
      _
    $region3: #{tpu_custom_call.1} parent=1 // pred_check_branch
      %11 = sbr.rel (0) target = $region5
    $region4: #{tpu_custom_call.1} parent=1 // pred_region
      %s13 = ssub.s32 256, 256
      %14 = vsyncadd [#allocation3], %s13
      %s15 = sshll.u32 [#allocation2], 4
      %s16 = int_to_ptr.vmem [resolvable:$true] %s15
      %21 = dma.hbm_to_vmem [thread:$0]  %s0, 256, %s16, [#allocation3], 128, 128, 8
    $region5: #{tpu_custom_call.1} parent=1 // pred_fallthru
      _
    // Predicated region
    $region6: #{tpu_custom_call.1} parent=1 // pred_check
      _
    $region7: #{tpu_custom_call.1} parent=1 // pred_check_branch
      %23 = sbr.rel (0) target = $region9
    $region8: #{tpu_custom_call.1} parent=1 // pred_region
      _
    $region9: #{tpu_custom_call.1} parent=1 // pred_fallthru
      _
    // Predicated region
    $region10: #{tpu_custom_call.1} parent=1 // pred_check
      _
    $region11: #{tpu_custom_call.1} parent=1 // pred_check_branch
      %25 = sbr.rel (0) target = $region13
    $region12: #{tpu_custom_call.1} parent=1 // pred_region
      _
    $region13: #{tpu_custom_call.1} parent=1 // pred_fallthru
      _
    // Predicated region
    $region14: #{tpu_custom_call.1} parent=1 // pred_check
      _
    $region15: #{tpu_custom_call.1} parent=1 // pred_check_branch
      %27 = sbr.rel (0) target = $region17
    $region16: #{tpu_custom_call.1} parent=1 // pred_region
      %28 = dma.done [#allocation3], 256
    $region17: #{tpu_custom_call.1} parent=1 // pred_fallthru
      _
    %v29 = vld [vmem:[#allocation2] sm:$0xff]
    %v30 = vld [vmem:[#allocation2 + $0x8] sm:$0xff]
    %vm31 = vcmask 261120
    %v32 = vsel %vm31, %v29, 0.0
    %33 = vadd.xlane.f32.xlu0 %v32
    %v34 = vpop.xlane.xlu0 %33
    %v35 = vsel %vm31, %v30, 0.0
    %36 = vadd.xlane.f32.xlu0 %v35
    %v37 = vpop.xlane.xlu0 %36
    %v38 = vmul.f32 %v34, 0.03125
    %v39 = vmul.f32 %v37, 0.03125
    %v40 = vsub.f32 %v29, %v38
    %v41 = vsub.f32 %v30, %v39
    %v42 = vmul.f32 %v40, %v40
    %v43 = vmul.f32 %v41, %v41
    %v44 = vsel %vm31, %v42, 0.0
    %45 = vadd.xlane.f32.xlu0 %v44
    %v46 = vpop.xlane.xlu0 %45
    %v47 = vsel %vm31, %v43, 0.0
    %48 = vadd.xlane.f32.xlu0 %v47
    %v49 = vpop.xlane.xlu0 %48
    %v50 = vmul.f32 %v46, 0.032258064
    %v51 = vmul.f32 %v49, 0.032258064
    %v52 = vrsqrt.pop %v50
    %v53 = vmul.f32 %v50, %v52
    %vm54 = vcmp.eq.f32.partialorder %v50, inf
    %v55 = vsel %vm54, %v50, %v53
    %vm56 = vcmp.eq.f32.partialorder %v50, 0.0
    %v57 = vand.u32 %v50, 2147483648
    %v58 = vsel %vm56, %v57, %v55
    %v59 = vrsqrt.pop %v51
    %v60 = vmul.f32 %v51, %v59
    %vm61 = vcmp.eq.f32.partialorder %v51, inf
    %v62 = vsel %vm61, %v51, %v60
    %vm63 = vcmp.eq.f32.partialorder %v51, 0.0
    %v64 = vand.u32 %v51, 2147483648
    %v65 = vsel %vm63, %v64, %v62
    %v66 = vadd.f32 %v58, 1e-06
    %v67 = vadd.f32 %v65, 1e-06
    %v68 = vrcp.pop %v66
    %v69 = vrcp.pop %v67
    %v70 = vld [vmem:[%s1] sm:$0x1]
    %v71 = vld [vmem:[%s2] sm:$0x1]
    %v72 = vmul.f32 %v40, %v68
    %v73 = vmul.f32 %v41, %v69
    %v75 = vlaneseq
    %v76 = vshrl.u32 %v75, 7
    %v77 = vsub.s32 0, %v76
    %v78 = vrot.slane %v70, %v77
    %v80 = vmul.f32 %v78, %v72
    %v81 = vmul.f32 %v78, %v73
    %v83 = vlaneseq
    %v84 = vshrl.u32 %v83, 7
    %v85 = vsub.s32 0, %v84
    %v86 = vrot.slane %v71, %v85
    %v88 = vadd.f32 %v80, %v86
    %v89 = vadd.f32 %v81, %v86
    %v90 = vadd.f32 %v29, %v88
    %v91 = vadd.f32 %v30, %v89
    %92 = vst.msk [vmem:[#allocation5] sm:$0xff] %vm31, %v90
    %93 = vst.msk [vmem:[#allocation5 + $0x8] sm:$0xff] %vm31, %v91
    // Predicated region
    $region18: #{tpu_custom_call.1} parent=1 // pred_check
      _
    $region19: #{tpu_custom_call.1} parent=1 // pred_check_branch
      %95 = sbr.rel (0) target = $region21
    $region20: #{tpu_custom_call.1} parent=1 // pred_region
      %s97 = ssub.s32 256, 256
      %98 = vsyncadd [#allocation4], %s97
      %s99 = sshll.u32 [#allocation5], 4
      %s100 = int_to_ptr.vmem [resolvable:$true] %s99
      %105 = dma.vmem_to_hbm [thread:$0]  %s100, 256, %s3, [#allocation4], 128, 128, 8
    $region21: #{tpu_custom_call.1} parent=1 // pred_fallthru
      _
    // Predicated region
    $region22: #{tpu_custom_call.1} parent=1 // pred_check
      _
    $region23: #{tpu_custom_call.1} parent=1 // pred_check_branch
      %107 = sbr.rel (0) target = $region25
    $region24: #{tpu_custom_call.1} parent=1 // pred_region
      %108 = dma.done [#allocation4], 256
    $region25: #{tpu_custom_call.1} parent=1 // pred_fallthru
      _
    %109 = vsyncpa [#allocation3], 1
    %110 = vsyncpa [#allocation4], 1

</llo_original>
